<compile_context>
chip_gen: v5e
topology: v5e:2x2
jax: 0.10.0
libtpu: 0.0.40
codegen_flags: <defaults>
</compile_context>

<pallas_src>
import jax
import jax.numpy as jnp
import numpy as np
from jax.experimental import pallas as pl
from jax.experimental.pallas import tpu as pltpu

STATE_DIM = 21
TL_SIZE = 7
ACTION_PARAM_SIZE = 4
IN_DIM = STATE_DIM + TL_SIZE + ACTION_PARAM_SIZE   # 32
HIDDEN = 128
LANE = 128
MAX_TILE_B = 4096   # rows (lanes) per grid step for large batches


def _round_up(x, m):
    return ((x + m - 1) // m) * m


def _disc_kernel(xT_ref, w1T_ref, b1_ref, w2_ref, b2_ref, o_ref):
    # xT : (32, Tb)   input_dtype (bf16 or f32), batch along lanes (dense)
    # w1T: (128, 32)  input_dtype
    # b1 : (128, 1)   f32
    # w2 : (128, 1)   f32   (fc2 weight as a column, broadcast along lanes)
    # b2 : (1, 1)     f32   in SMEM
    # o  : (1, Tb)    f32   lane-dense output row
    #
    # fc1 (transposed): h^T = W1^T @ x^T  -> (128, Tb), f32 accumulation.
    h = jnp.dot(w1T_ref[...], xT_ref[...], preferred_element_type=jnp.float32)
    h = jnp.maximum(h + b1_ref[...], 0.0)                        # ReLU (VPU)
    # fc2 (N=1): VPU multiply + cross-sublane reduce -> already lane-dense.
    y = jnp.sum(h * w2_ref[...], axis=0, keepdims=True) + b2_ref[0, 0]
    # sigmoid; exp on EUP, exact reciprocal (keeps f32 parity with PyTorch).
    o_ref[...] = pl.reciprocal(1.0 + jnp.exp(-y), approx=False)


def _prepare_inputs(state, tl_code, action_params):
    state = jnp.reshape(state, (-1, STATE_DIM)).astype(jnp.float32)
    tl_code = jnp.reshape(tl_code, (-1, TL_SIZE)).astype(jnp.float32)
    action_params = jnp.reshape(
        action_params, (-1, ACTION_PARAM_SIZE)).astype(jnp.float32)
    return state, tl_code, action_params


def _xla_forward(state, tl_code, action_params, params):
    w1, b1, w2, b2 = params
    cat = jnp.concatenate([state, tl_code, action_params], axis=1)
    h = jnp.maximum(cat @ w1 + b1, 0.0)
    return jax.nn.sigmoid(h @ w2 + b2)


def discriminator_forward(state, tl_code, action_params, params, *,
                          min_pallas_batch=256, input_dtype=jnp.bfloat16):
    """Full forward pass matching the PyTorch module.

    input_dtype: dtype used for the packed operand + W1 on the MXU path.
      bf16 (default) halves the dominant HBM read traffic (kernel is
      bandwidth-bound); pass jnp.float32 for bit-exact PyTorch parity.
    """
    state, tl_code, action_params = _prepare_inputs(state, tl_code, action_params)
    B = state.shape[0]
    w1, b1, w2, b2 = params

    # Tiny batches: kernel-launch + per-step overhead dominates; XLA wins.
    if B < min_pallas_batch:
        return _xla_forward(state, tl_code, action_params, params)

    # --- Tile policy -------------------------------------------------------
    # Batch lives on the lane axis, so tile_b must be a multiple of 128.
    # Aim for >= 2 grid steps (v7x megacore + pipelining), capped at
    # MAX_TILE_B rows per step.
    b_ceil = _round_up(B, LANE)
    tile_b = max(LANE, min(MAX_TILE_B, _round_up(b_ceil // 2, LANE)))
    b_pad = _round_up(B, tile_b)
    num_tiles = b_pad // tile_b

    # --- Feature-major packed operand (32, b_pad) --------------------------
    # Single lane-dense operand; the concat/transpose/pad is one wrapper-side
    # materialization (the concat had to happen somewhere anyway) and replaces
    # three 128-lane-padded narrow reads per tile inside the kernel.
    xT = jnp.concatenate(
        [state.T, tl_code.T, action_params.T], axis=0).astype(input_dtype)
    if b_pad != B:
        xT = jnp.pad(xT, ((0, 0), (0, b_pad - B)))

    w1T = w1.T.astype(input_dtype)                       # (128, 32)
    b1_col = b1.reshape(HIDDEN, 1).astype(jnp.float32)   # (128, 1)
    w2_col = w2.reshape(HIDDEN, 1).astype(jnp.float32)   # (128, 1)
    b2_sc = b2.reshape(1, 1).astype(jnp.float32)         # scalar -> SMEM

    itemsize = jnp.dtype(input_dtype).itemsize
    cost = pl.CostEstimate(
        flops=2 * b_pad * IN_DIM * HIDDEN + 4 * b_pad * HIDDEN,
        transcendentals=b_pad,
        bytes_accessed=(IN_DIM * b_pad * itemsize          # xT read
                        + b_pad * 4                        # output write
                        + HIDDEN * IN_DIM * itemsize       # W1
                        + (2 * HIDDEN + 1) * 4),           # b1, w2, b2
    )

    out = pl.pallas_call(
        _disc_kernel,
        out_shape=jax.ShapeDtypeStruct((1, b_pad), jnp.float32),
        grid=(num_tiles,),
        in_specs=[
            pl.BlockSpec((IN_DIM, tile_b), lambda i: (0, i)),   # packed input
            pl.BlockSpec((HIDDEN, IN_DIM), lambda i: (0, 0)),   # W1^T resident
            pl.BlockSpec((HIDDEN, 1), lambda i: (0, 0)),        # b1 column
            pl.BlockSpec((HIDDEN, 1), lambda i: (0, 0)),        # w2 column
            pl.BlockSpec(memory_space=pltpu.MemorySpace.SMEM),  # b2 scalar
        ],
        out_specs=pl.BlockSpec((1, tile_b), lambda i: (0, i)),  # lane-dense row
        compiler_params=pltpu.CompilerParams(
            dimension_semantics=("parallel",),       # v7x: 2 TCs split the batch
            vmem_limit_bytes=32 * 1024 * 1024),
        cost_estimate=cost,
    )(xT, w1T, b1_col, w2_col, b2_sc)

    return out[0, :B].reshape(B, 1)


def init_params(key):
    """Deterministic synthetic parameters (PyTorch-Linear-style uniform init)."""
    k1, k2, k3, k4 = jax.random.split(key, 4)
    bound1 = 1.0 / np.sqrt(IN_DIM)
    bound2 = 1.0 / np.sqrt(HIDDEN)
    # weights stored pre-transposed: (in, out)
    w1 = jax.random.uniform(k1, (IN_DIM, HIDDEN), jnp.float32, -bound1, bound1)
    b1 = jax.random.uniform(k2, (HIDDEN,), jnp.float32, -bound1, bound1)
    w2 = jax.random.uniform(k3, (HIDDEN, 1), jnp.float32, -bound2, bound2)
    b2 = jax.random.uniform(k4, (1,), jnp.float32, -bound2, bound2)
    return w1, b1, w2, b2


def reference_forward(state, tl_code, action_params, params):
    """Pure-JAX reference for correctness checking."""
    state, tl_code, action_params = _prepare_inputs(state, tl_code, action_params)
    return _xla_forward(state, tl_code, action_params, params)


if __name__ == "__main__":
    key = jax.random.PRNGKey(0)
    kp, ks, kt, ka = jax.random.split(key, 4)
    params = init_params(kp)

    def make_inputs(B):
        s = jax.random.normal(ks, (B, STATE_DIM), jnp.float32)
        t = jax.random.normal(kt, (B, TL_SIZE), jnp.float32)
        a = jax.random.normal(ka, (B, ACTION_PARAM_SIZE), jnp.float32)
        return s, t, a

    # Case 1: tiny batch, force the Pallas path, f32 (bit-exact vs reference).
    B = 8
    s, t, a = make_inputs(B)
    out = discriminator_forward(s, t, a, params, min_pallas_batch=0,
                                input_dtype=jnp.float32)
    out = jax.block_until_ready(out)
    ref = reference_forward(s, t, a, params)
    assert out.shape == (B, 1)
    np.testing.assert_allclose(np.asarray(out), np.asarray(ref),
                               rtol=1e-5, atol=1e-5)

    # Case 2: batch not a multiple of 128 — exercises the padding path.
    B2 = 10
    s2, t2, a2 = make_inputs(B2)
    out2 = discriminator_forward(s2, t2, a2, params, min_pallas_batch=0,
                                 input_dtype=jnp.float32)
    out2 = jax.block_until_ready(out2)
    ref2 = reference_forward(s2, t2, a2, params)
    assert out2.shape == (B2, 1)
    np.testing.assert_allclose(np.asarray(out2), np.asarray(ref2),
                               rtol=1e-5, atol=1e-5)

    # Case 3: multi-tile grid (>=2 steps), f32, exact check of tiling/index_map.
    B3 = 384
    s3, t3, a3 = make_inputs(B3)
    out3 = discriminator_forward(s3, t3, a3, params, input_dtype=jnp.float32)
    out3 = jax.block_until_ready(out3)
    ref3 = reference_forward(s3, t3, a3, params)
    assert out3.shape == (B3, 1)
    np.testing.assert_allclose(np.asarray(out3), np.asarray(ref3),
                               rtol=1e-5, atol=1e-5)

    # Case 4: default bf16 input path (bandwidth-optimized) — looser tolerance.
    out4 = discriminator_forward(s3, t3, a3, params)   # bf16 by default
    out4 = jax.block_until_ready(out4)
    assert out4.shape == (B3, 1)
    np.testing.assert_allclose(np.asarray(out4), np.asarray(ref3),
                               rtol=2e-2, atol=2e-2)

    print("KERNEL_OK")
</pallas_src>

<mosaic_0001>
module attributes {stable_mosaic.version = 11 : i64} {
  func.func @_disc_kernel(%arg0: i32, %arg1: memref<32x128xf32, #tpu.memory_space<vmem>>, %arg2: memref<128x32xf32, #tpu.memory_space<vmem>>, %arg3: memref<128x1xf32, #tpu.memory_space<vmem>>, %arg4: memref<128x1xf32, #tpu.memory_space<vmem>>, %arg5: memref<1x1xf32, #tpu.memory_space<smem>>, %arg6: memref<1x128xf32, #tpu.memory_space<vmem>>) attributes {dimension_semantics = [#tpu.dimension_semantics<parallel>], iteration_bounds = array<i64: 1>, scalar_prefetch = 0 : i64, scratch_operands = 0 : i64, tpu.core_type = #tpu.core_type<tc>, window_params = [{transform_indices = @transform_0, window_bounds = array<i64: 32, 128>}, {pipeline_mode = #tpu.pipeline_mode<synchronous>, transform_indices = @transform_1, window_bounds = array<i64: 128, 32>}, {pipeline_mode = #tpu.pipeline_mode<synchronous>, transform_indices = @transform_2, window_bounds = array<i64: 128, 1>}, {pipeline_mode = #tpu.pipeline_mode<synchronous>, transform_indices = @transform_3, window_bounds = array<i64: 128, 1>}, {transform_indices = @transform_4, window_bounds = array<i64: 1, 1>}, {transform_indices = @transform_5, window_bounds = array<i64: 1, 128>}]} {
    %c0 = arith.constant 0 : index
    %c0_0 = arith.constant 0 : index
    %0 = vector.load %arg2[%c0, %c0_0] : memref<128x32xf32, #tpu.memory_space<vmem>>, vector<128x32xf32>
    %c0_1 = arith.constant 0 : index
    %c0_2 = arith.constant 0 : index
    %1 = vector.load %arg1[%c0_1, %c0_2] : memref<32x128xf32, #tpu.memory_space<vmem>>, vector<32x128xf32>
    %cst = arith.constant dense<0.000000e+00> : vector<128x128xf32>
    %2 = tpu.matmul %0, %1, %cst {dimension_numbers = #tpu.dot_dimension_numbers<[1], [0], [0], [1], [0, 0, 1, 1], [], []>} : vector<128x32xf32>, vector<32x128xf32>, vector<128x128xf32> -> vector<128x128xf32>
    %c0_3 = arith.constant 0 : index
    %c0_4 = arith.constant 0 : index
    %3 = vector.load %arg3[%c0_3, %c0_4] : memref<128x1xf32, #tpu.memory_space<vmem>>, vector<128x1xf32>
    %4 = vector.broadcast %3 : vector<128x1xf32> to vector<128x128xf32>
    %5 = arith.addf %2, %4 : vector<128x128xf32>
    %cst_5 = arith.constant 0.000000e+00 : f32
    %6 = vector.broadcast %cst_5 : f32 to vector<128x128xf32>
    %7 = arith.maximumf %5, %6 : vector<128x128xf32>
    %c0_6 = arith.constant 0 : index
    %c0_7 = arith.constant 0 : index
    %8 = vector.load %arg4[%c0_6, %c0_7] : memref<128x1xf32, #tpu.memory_space<vmem>>, vector<128x1xf32>
    %9 = vector.broadcast %8 : vector<128x1xf32> to vector<128x128xf32>
    %10 = arith.mulf %7, %9 : vector<128x128xf32>
    %cst_8 = arith.constant dense<0.000000e+00> : vector<128xf32>
    %11 = vector.multi_reduction <add>, %10, %cst_8 [0] : vector<128x128xf32> to vector<128xf32>
    %12 = vector.shape_cast %11 : vector<128xf32> to vector<1x128xf32>
    %c0_9 = arith.constant 0 : index
    %c0_10 = arith.constant 0 : index
    %13 = memref.load %arg5[%c0_9, %c0_10] : memref<1x1xf32, #tpu.memory_space<smem>>
    %14 = vector.broadcast %13 : f32 to vector<1x128xf32>
    %15 = arith.addf %12, %14 : vector<1x128xf32>
    %cst_11 = arith.constant 0.000000e+00 : f32
    %16 = vector.broadcast %cst_11 : f32 to vector<1x128xf32>
    %17 = arith.subf %16, %15 : vector<1x128xf32>
    %18 = math.exp %17 : vector<1x128xf32>
    %cst_12 = arith.constant 1.000000e+00 : f32
    %19 = vector.broadcast %cst_12 : f32 to vector<1x128xf32>
    %20 = arith.addf %19, %18 : vector<1x128xf32>
    %21 = tpu.reciprocal %20 : vector<1x128xf32> -> vector<1x128xf32>
    %c0_13 = arith.constant 0 : index
    %c0_14 = arith.constant 0 : index
    %22 = vector.load %arg6[%c0_13, %c0_14] : memref<1x128xf32, #tpu.memory_space<vmem>>, vector<1x128xf32>
    tpu.vector_store %arg6[%c0_13, %c0_14], %21 {strides = array<i32>} : memref<1x128xf32, #tpu.memory_space<vmem>>, vector<1x128xf32>,
    return
  }
  func.func @transform_0(%arg0: i32) -> (i32, i32) {
    %c0_i32 = arith.constant 0 : i32
    %c0_i32_0 = arith.constant 0 : i32
    return %c0_i32, %arg0 : i32, i32
  }
  func.func @transform_1(%arg0: i32) -> (i32, i32) {
    %c0_i32 = arith.constant 0 : i32
    %c0_i32_0 = arith.constant 0 : i32
    %c0_i32_1 = arith.constant 0 : i32
    return %c0_i32, %c0_i32_0 : i32, i32
  }
  func.func @transform_2(%arg0: i32) -> (i32, i32) {
    %c0_i32 = arith.constant 0 : i32
    %c0_i32_0 = arith.constant 0 : i32
    %c0_i32_1 = arith.constant 0 : i32
    return %c0_i32, %c0_i32_0 : i32, i32
  }
  func.func @transform_3(%arg0: i32) -> (i32, i32) {
    %c0_i32 = arith.constant 0 : i32
    %c0_i32_0 = arith.constant 0 : i32
    %c0_i32_1 = arith.constant 0 : i32
    return %c0_i32, %c0_i32_0 : i32, i32
  }
  func.func @transform_4(%arg0: i32) -> (i32, i32) {
    %c0_i32 = arith.constant 0 : i32
    %c0_i32_0 = arith.constant 0 : i32
    %c0_i32_1 = arith.constant 0 : i32
    return %c0_i32, %c0_i32_0 : i32, i32
  }
  func.func @transform_5(%arg0: i32) -> (i32, i32) {
    %c0_i32 = arith.constant 0 : i32
    %c0_i32_0 = arith.constant 0 : i32
    return %c0_i32, %arg0 : i32, i32
  }
}

</mosaic_0001>

<llo_original>
// kernel: tpu_custom_call.1
$region0: #{tpu_custom_call.1}
  #allocation0 [shape = 'u32[]', space=smem, size = 0x4, offset = 0x4, fixed_abs, tag = 'smem constant byte address 0x4 - core index']
  #allocation1 [shape = 'u32[72,128]{1,0:T(1,128)}', space=vmem, size = 0x9000, scoped, tag = 'internal scratch']
  #allocation2 [shape = 'f32[1,1]{1,0:T(1,128)S(6)}', space=smem, size = 0x200, scoped, tag = 'scoped memory for tpu_custom_call.1']
  %s0 = inlined_call_operand.vmem [shape: f32[32,128], index: 0, kind: input, shape index: {}]
  %s1 = inlined_call_operand.vmem [shape: f32[128,32], index: 1, kind: input, shape index: {}]
  %s2 = inlined_call_operand.vmem [shape: f32[128,1], index: 2, kind: input, shape index: {}]
  %s3 = inlined_call_operand.vmem [shape: f32[128,1], index: 3, kind: input, shape index: {}]
  %s4 = inlined_call_operand.<no memory space> [shape: f32[1,1], index: 4, kind: input, shape index: {}]
  %s5 = inlined_call_operand.hbm [shape: f32[1,128], index: 5, kind: output, shape index: {}]
  %s6 = sld [smem:[#allocation0]]
  $region30: #{tpu_custom_call.1} parent=0
    _
  %s8 = ssub.s32 1, %s6
  %s9 = scalar_select 0, %s8, %s6
  %10 = sst [smem:[#allocation2]] %s4
  $region1: #{tpu_custom_call.1} parent=0
    #allocation3 [shape = 'u8[512]{0}', space=vmem, size = 0x400, scoped, tag = 'output window, operand 0, single buffered']
    #allocation4 [shape = 's32[1]{0}', space=sflag, size = 0x4, scoped, tag = 'scoped memory for tpu_custom_call.1']
    %11 = vsyncpa [#allocation4], 0
    // Predicated region
    $region2: #{tpu_custom_call.1} parent=1 // pred_check
      _
    $region3: #{tpu_custom_call.1} parent=1 // pred_check_branch
      %13 = sbr.rel (0) target = $region5
    $region4: #{tpu_custom_call.1} parent=1 // pred_region
      _
    $region5: #{tpu_custom_call.1} parent=1 // pred_fallthru
      _
    // Predicated region
    $region6: #{tpu_custom_call.1} parent=1 // pred_check
      _
    $region7: #{tpu_custom_call.1} parent=1 // pred_check_branch
      %15 = sbr.rel (0) target = $region9
    $region8: #{tpu_custom_call.1} parent=1 // pred_region
      _
    $region9: #{tpu_custom_call.1} parent=1 // pred_fallthru
      _
    // Predicated region
    $region10: #{tpu_custom_call.1} parent=1 // pred_check
      _
    $region11: #{tpu_custom_call.1} parent=1 // pred_check_branch
      %17 = sbr.rel (0) target = $region13
    $region12: #{tpu_custom_call.1} parent=1 // pred_region
      _
    $region13: #{tpu_custom_call.1} parent=1 // pred_fallthru
      _
    // Predicated region
    $region14: #{tpu_custom_call.1} parent=1 // pred_check
      _
    $region15: #{tpu_custom_call.1} parent=1 // pred_check_branch
      %19 = sbr.rel (0) target = $region17
    $region16: #{tpu_custom_call.1} parent=1 // pred_region
      _
    $region17: #{tpu_custom_call.1} parent=1 // pred_fallthru
      _
    // Predicated region
    $region18: #{tpu_custom_call.1} parent=1 // pred_check
      _
    $region19: #{tpu_custom_call.1} parent=1 // pred_check_branch
      %21 = sbr.rel (0) target = $region21
    $region20: #{tpu_custom_call.1} parent=1 // pred_region
      _
    $region21: #{tpu_custom_call.1} parent=1 // pred_fallthru
      _
    %v22 = vld [vmem:[%s1] sm:$0xff]
    %v23 = vld [vmem:[%s1 + $0x8] sm:$0xff]
    %v24 = vld [vmem:[%s1 + $0x10] sm:$0xff]
    %v25 = vld [vmem:[%s1 + $0x18] sm:$0xff]
    %v26 = vld [vmem:[%s1 + $0x20] sm:$0xff]
    %v27 = vld [vmem:[%s1 + $0x28] sm:$0xff]
    %v28 = vld [vmem:[%s1 + $0x30] sm:$0xff]
    %v29 = vld [vmem:[%s1 + $0x38] sm:$0xff]
    %v30 = vld [vmem:[%s1 + $0x40] sm:$0xff]
    %v31 = vld [vmem:[%s1 + $0x48] sm:$0xff]
    %v32 = vld [vmem:[%s1 + $0x50] sm:$0xff]
    %v33 = vld [vmem:[%s1 + $0x58] sm:$0xff]
    %v34 = vld [vmem:[%s1 + $0x60] sm:$0xff]
    %v35 = vld [vmem:[%s1 + $0x68] sm:$0xff]
    %v36 = vld [vmem:[%s1 + $0x70] sm:$0xff]
    %v37 = vld [vmem:[%s1 + $0x78] sm:$0xff]
    %v38 = vld [vmem:[%s0] sm:$0xff]
    %v39 = vld [vmem:[%s0 + $0x8] sm:$0xff]
    %v40 = vld [vmem:[%s0 + $0x10] sm:$0xff]
    %v41 = vld [vmem:[%s0 + $0x18] sm:$0xff]
    %v42 = vld [vmem:[%s2] sm:$0xff]
    %v43 = vld [vmem:[%s2 + $0x8] sm:$0xff]
    %v44 = vld [vmem:[%s2 + $0x10] sm:$0xff]
    %v45 = vld [vmem:[%s2 + $0x18] sm:$0xff]
    %v46 = vld [vmem:[%s2 + $0x20] sm:$0xff]
    %v47 = vld [vmem:[%s2 + $0x28] sm:$0xff]
    %v48 = vld [vmem:[%s2 + $0x30] sm:$0xff]
    %v49 = vld [vmem:[%s2 + $0x38] sm:$0xff]
    %v50 = vld [vmem:[%s2 + $0x40] sm:$0xff]
    %v51 = vld [vmem:[%s2 + $0x48] sm:$0xff]
    %v52 = vld [vmem:[%s2 + $0x50] sm:$0xff]
    %v53 = vld [vmem:[%s2 + $0x58] sm:$0xff]
    %v54 = vld [vmem:[%s2 + $0x60] sm:$0xff]
    %v55 = vld [vmem:[%s2 + $0x68] sm:$0xff]
    %v56 = vld [vmem:[%s2 + $0x70] sm:$0xff]
    %v57 = vld [vmem:[%s2 + $0x78] sm:$0xff]
    %59 = vset.pattern.permute.xlu0 0
    %60 = vperm.xlu0 %59, %v42
    %v61 = vpop.permute.xlu0 %60
    %64 = vset.pattern.permute.xlu0 0
    %65 = vperm.xlu0 %64, %v43
    %v66 = vpop.permute.xlu0 %65
    %69 = vset.pattern.permute.xlu0 0
    %70 = vperm.xlu0 %69, %v44
    %v71 = vpop.permute.xlu0 %70
    %74 = vset.pattern.permute.xlu0 0
    %75 = vperm.xlu0 %74, %v45
    %v76 = vpop.permute.xlu0 %75
    %79 = vset.pattern.permute.xlu0 0
    %80 = vperm.xlu0 %79, %v46
    %v81 = vpop.permute.xlu0 %80
    %84 = vset.pattern.permute.xlu0 0
    %85 = vperm.xlu0 %84, %v47
    %v86 = vpop.permute.xlu0 %85
    %89 = vset.pattern.permute.xlu0 0
    %90 = vperm.xlu0 %89, %v48
    %v91 = vpop.permute.xlu0 %90
    %94 = vset.pattern.permute.xlu0 0
    %95 = vperm.xlu0 %94, %v49
    %v96 = vpop.permute.xlu0 %95
    %99 = vset.pattern.permute.xlu0 0
    %100 = vperm.xlu0 %99, %v50
    %v101 = vpop.permute.xlu0 %100
    %104 = vset.pattern.permute.xlu0 0
    %105 = vperm.xlu0 %104, %v51
    %v106 = vpop.permute.xlu0 %105
    %109 = vset.pattern.permute.xlu0 0
    %110 = vperm.xlu0 %109, %v52
    %v111 = vpop.permute.xlu0 %110
    %114 = vset.pattern.permute.xlu0 0
    %115 = vperm.xlu0 %114, %v53
    %v116 = vpop.permute.xlu0 %115
    %119 = vset.pattern.permute.xlu0 0
    %120 = vperm.xlu0 %119, %v54
    %v121 = vpop.permute.xlu0 %120
    %124 = vset.pattern.permute.xlu0 0
    %125 = vperm.xlu0 %124, %v55
    %v126 = vpop.permute.xlu0 %125
    %129 = vset.pattern.permute.xlu0 0
    %130 = vperm.xlu0 %129, %v56
    %v131 = vpop.permute.xlu0 %130
    %134 = vset.pattern.permute.xlu0 0
    %135 = vperm.xlu0 %134, %v57
    %v136 = vpop.permute.xlu0 %135
    %vm138 = vcmask 261120
    %v140 = vsel %vm138, %v22, 0
    %v143 = vsel %vm138, %v23, 0
    %v146 = vsel %vm138, %v24, 0
    %v149 = vsel %vm138, %v25, 0
    %v152 = vsel %vm138, %v26, 0
    %v155 = vsel %vm138, %v27, 0
    %v158 = vsel %vm138, %v28, 0
    %v161 = vsel %vm138, %v29, 0
    %v164 = vsel %vm138, %v30, 0
    %v167 = vsel %vm138, %v31, 0
    %v170 = vsel %vm138, %v32, 0
    %v173 = vsel %vm138, %v33, 0
    %v176 = vsel %vm138, %v34, 0
    %v179 = vsel %vm138, %v35, 0
    %v182 = vsel %vm138, %v36, 0
    %v185 = vsel %vm138, %v37, 0
    %187 = vmatpush.msra.mxu0 0.0
    %188 = vmatpush.msra.mxu0 0.0
    %189 = vmatpush.msra.mxu0 0.0
    %190 = vmatpush.msra.mxu0 0.0
    %191 = vmatpush.msra.mxu0 0.0
    %192 = vmatpush.msra.mxu0 0.0
    %193 = vmatpush.msra.mxu0 0.0
    %194 = vmatpush.msra.mxu0 0.0
    %195 = vmatpush.msra.mxu0 0.0
    %196 = vmatpush.msra.mxu0 0.0
    %197 = vmatpush.msra.mxu0 0.0
    %198 = vmatpush.msra.mxu0 0.0
    %199 = vmatpush.msra.mxu0 %v41
    %200 = vmatpush.msra.mxu0 %v40
    %201 = vmatpush.msra.mxu0 %v39
    %202 = vmatpush.msra.mxu0 %v38
    %203 = vmatmul.f32.gmra.mxu0 %v140
    %v204 = vpop.f32.mrf.mxu0
    %v205 = vadd.f32 %v61, %v204
    %206 = vmatmul.f32.gmra.mxu0 %v143
    %v207 = vpop.f32.mrf.mxu0
    %v208 = vadd.f32 %v66, %v207
    %209 = vmatmul.f32.gmra.mxu0 %v146
    %v210 = vpop.f32.mrf.mxu0
    %v211 = vadd.f32 %v71, %v210
    %212 = vmatmul.f32.gmra.mxu0 %v149
    %v213 = vpop.f32.mrf.mxu0
    %v214 = vadd.f32 %v76, %v213
    %215 = vmatmul.f32.gmra.mxu0 %v152
    %v216 = vpop.f32.mrf.mxu0
    %v217 = vadd.f32 %v81, %v216
    %218 = vmatmul.f32.gmra.mxu0 %v155
    %v219 = vpop.f32.mrf.mxu0
    %v220 = vadd.f32 %v86, %v219
    %221 = vmatmul.f32.gmra.mxu0 %v158
    %v222 = vpop.f32.mrf.mxu0
    %v223 = vadd.f32 %v91, %v222
    %224 = vmatmul.f32.gmra.mxu0 %v161
    %v225 = vpop.f32.mrf.mxu0
    %v226 = vadd.f32 %v96, %v225
    %227 = vmatmul.f32.gmra.mxu0 %v164
    %v228 = vpop.f32.mrf.mxu0
    %v229 = vadd.f32 %v101, %v228
    %230 = vmatmul.f32.gmra.mxu0 %v167
    %v231 = vpop.f32.mrf.mxu0
    %v232 = vadd.f32 %v106, %v231
    %233 = vmatmul.f32.gmra.mxu0 %v170
    %v234 = vpop.f32.mrf.mxu0
    %v235 = vadd.f32 %v111, %v234
    %236 = vmatmul.f32.gmra.mxu0 %v173
    %v237 = vpop.f32.mrf.mxu0
    %v238 = vadd.f32 %v116, %v237
    %239 = vmatmul.f32.gmra.mxu0 %v176
    %v240 = vpop.f32.mrf.mxu0
    %v241 = vadd.f32 %v121, %v240
    %242 = vmatmul.f32.gmra.mxu0 %v179
    %v243 = vpop.f32.mrf.mxu0
    %v244 = vadd.f32 %v126, %v243
    %245 = vmatmul.f32.gmra.mxu0 %v182
    %v246 = vpop.f32.mrf.mxu0
    %v247 = vadd.f32 %v131, %v246
    %248 = vmatmul.f32.gmra.mxu0 %v185
    %v249 = vpop.f32.mrf.mxu0
    %v250 = vadd.f32 %v136, %v249
    %251 = vdwg.mxu0
    %v252 = vmax.f32 %v205, 0.0
    %v253 = vmax.f32 %v208, 0.0
    %v254 = vmax.f32 %v211, 0.0
    %v255 = vmax.f32 %v214, 0.0
    %v256 = vmax.f32 %v217, 0.0
    %v257 = vmax.f32 %v220, 0.0
    %v258 = vmax.f32 %v223, 0.0
    %v259 = vmax.f32 %v226, 0.0
    %v260 = vmax.f32 %v229, 0.0
    %v261 = vmax.f32 %v232, 0.0
    %v262 = vmax.f32 %v235, 0.0
    %v263 = vmax.f32 %v238, 0.0
    %v264 = vmax.f32 %v241, 0.0
    %v265 = vmax.f32 %v244, 0.0
    %v266 = vmax.f32 %v247, 0.0
    %v267 = vmax.f32 %v250, 0.0
    %v268 = vld [vmem:[%s3] sm:$0xff]
    %v269 = vld [vmem:[%s3 + $0x8] sm:$0xff]
    %v270 = vld [vmem:[%s3 + $0x10] sm:$0xff]
    %v271 = vld [vmem:[%s3 + $0x18] sm:$0xff]
    %v272 = vld [vmem:[%s3 + $0x20] sm:$0xff]
    %v273 = vld [vmem:[%s3 + $0x28] sm:$0xff]
    %v274 = vld [vmem:[%s3 + $0x30] sm:$0xff]
    %v275 = vld [vmem:[%s3 + $0x38] sm:$0xff]
    %v276 = vld [vmem:[%s3 + $0x40] sm:$0xff]
    %v277 = vld [vmem:[%s3 + $0x48] sm:$0xff]
    %v278 = vld [vmem:[%s3 + $0x50] sm:$0xff]
    %v279 = vld [vmem:[%s3 + $0x58] sm:$0xff]
    %v280 = vld [vmem:[%s3 + $0x60] sm:$0xff]
    %v281 = vld [vmem:[%s3 + $0x68] sm:$0xff]
    %v282 = vld [vmem:[%s3 + $0x70] sm:$0xff]
    %v283 = vld [vmem:[%s3 + $0x78] sm:$0xff]
    %285 = vset.pattern.permute.xlu0 0
    %286 = vperm.xlu0 %285, %v268
    %v287 = vpop.permute.xlu0 %286
    %290 = vset.pattern.permute.xlu0 0
    %291 = vperm.xlu0 %290, %v269
    %v292 = vpop.permute.xlu0 %291
    %295 = vset.pattern.permute.xlu0 0
    %296 = vperm.xlu0 %295, %v270
    %v297 = vpop.permute.xlu0 %296
    %300 = vset.pattern.permute.xlu0 0
    %301 = vperm.xlu0 %300, %v271
    %v302 = vpop.permute.xlu0 %301
    %305 = vset.pattern.permute.xlu0 0
    %306 = vperm.xlu0 %305, %v272
    %v307 = vpop.permute.xlu0 %306
    %310 = vset.pattern.permute.xlu0 0
    %311 = vperm.xlu0 %310, %v273
    %v312 = vpop.permute.xlu0 %311
    %315 = vset.pattern.permute.xlu0 0
    %316 = vperm.xlu0 %315, %v274
    %v317 = vpop.permute.xlu0 %316
    %320 = vset.pattern.permute.xlu0 0
    %321 = vperm.xlu0 %320, %v275
    %v322 = vpop.permute.xlu0 %321
    %325 = vset.pattern.permute.xlu0 0
    %326 = vperm.xlu0 %325, %v276
    %v327 = vpop.permute.xlu0 %326
    %330 = vset.pattern.permute.xlu0 0
    %331 = vperm.xlu0 %330, %v277
    %v332 = vpop.permute.xlu0 %331
    %335 = vset.pattern.permute.xlu0 0
    %336 = vperm.xlu0 %335, %v278
    %v337 = vpop.permute.xlu0 %336
    %340 = vset.pattern.permute.xlu0 0
    %341 = vperm.xlu0 %340, %v279
    %v342 = vpop.permute.xlu0 %341
    %345 = vset.pattern.permute.xlu0 0
    %346 = vperm.xlu0 %345, %v280
    %v347 = vpop.permute.xlu0 %346
    %350 = vset.pattern.permute.xlu0 0
    %351 = vperm.xlu0 %350, %v281
    %v352 = vpop.permute.xlu0 %351
    %355 = vset.pattern.permute.xlu0 0
    %356 = vperm.xlu0 %355, %v282
    %v357 = vpop.permute.xlu0 %356
    %360 = vset.pattern.permute.xlu0 0
    %361 = vperm.xlu0 %360, %v283
    %v362 = vpop.permute.xlu0 %361
    %v364 = vmul.f32 %v252, %v287
    %v365 = vmul.f32 %v253, %v292
    %v366 = vmul.f32 %v254, %v297
    %v367 = vmul.f32 %v255, %v302
    %v368 = vmul.f32 %v256, %v307
    %v369 = vmul.f32 %v257, %v312
    %v370 = vmul.f32 %v258, %v317
    %v371 = vmul.f32 %v259, %v322
    %v372 = vmul.f32 %v260, %v327
    %v373 = vmul.f32 %v261, %v332
    %v374 = vmul.f32 %v262, %v337
    %v375 = vmul.f32 %v263, %v342
    %v376 = vmul.f32 %v264, %v347
    %v377 = vmul.f32 %v265, %v352
    %v378 = vmul.f32 %v266, %v357
    %v379 = vmul.f32 %v267, %v362
    %v380 = vadd.f32 %v364, %v365
    %v381 = vadd.f32 %v380, %v366
    %v382 = vadd.f32 %v381, %v367
    %v383 = vadd.f32 %v382, %v368
    %v384 = vadd.f32 %v383, %v369
    %v385 = vadd.f32 %v384, %v370
    %v386 = vadd.f32 %v385, %v371
    %v387 = vadd.f32 %v386, %v372
    %v388 = vadd.f32 %v387, %v373
    %v389 = vadd.f32 %v388, %v374
    %v390 = vadd.f32 %v389, %v375
    %v391 = vadd.f32 %v390, %v376
    %v392 = vadd.f32 %v391, %v377
    %v393 = vadd.f32 %v392, %v378
    %v394 = vadd.f32 %v393, %v379
    %v395 = vrot.slane %v394, 4
    %v396 = vadd.f32 %v394, %v395
    %v397 = vrot.slane %v396, 2
    %v398 = vadd.f32 %v396, %v397
    %v399 = vrot.slane %v398, 1
    %v400 = vadd.f32 %v398, %v399
    %s401 = sld [smem:[#allocation2]]
    %v402 = vstv %s401
    %v403 = vadd.f32 %v400, %v402
    %v404 = vsub.f32 0.0, %v403
    %v405 = vmul.f32 %v404, 1.442695
    %v406 = vpow.pop %v405
    %v407 = vadd.f32 %v406, 1.0
    %v408 = vrcp.pop %v407
    %v409 = vmul.f32 %v407, %v408
    %v410 = vsub.f32 1.0, %v409
    %v411 = vmul.f32 %v408, %v410
    %v412 = vadd.f32 %v408, %v411
    %vm413 = vweird.f32 %v407
    %vm414 = vweird.f32 %v408
    %vm415 = vmor %vm413, %vm414
    %v416 = vsel %vm415, %v408, %v412
    %v417 = vand.u32 2147483647, %v407
    %vm418 = vcmp.eq.f32.partialorder %v417, 8.507059e+37
    %v419 = vand.u32 %v407, 2147483648
    %v420 = vor.u32 1.1754944e-38, %v419
    %v421 = vsel %vm418, %v420, %v416
    %422 = vst [vmem:[#allocation3] sm:$0x1] %v421
    // Predicated region
    $region22: #{tpu_custom_call.1} parent=1 // pred_check
      _
    $region23: #{tpu_custom_call.1} parent=1 // pred_check_branch
      %424 = sbr.rel (0) target = $region25
    $region24: #{tpu_custom_call.1} parent=1 // pred_region
      %426 = vsyncadd [#allocation4], 0
      %s428 = sshll.u32 [#allocation3], 4
      %s429 = int_to_ptr.vmem [resolvable:$true] %s428
      %s430 = sshll.u32 %s5, 4
      %s431 = int_to_ptr.hbm [resolvable:$true] %s430
      %433 = dma.vmem_to_hbm [thread:$0]  %s429, 16, %s431, [#allocation4]
    $region25: #{tpu_custom_call.1} parent=1 // pred_fallthru
      _
    // Predicated region
    $region26: #{tpu_custom_call.1} parent=1 // pred_check
      _
    $region27: #{tpu_custom_call.1} parent=1 // pred_check_branch
      %435 = sbr.rel (0) target = $region29
    $region28: #{tpu_custom_call.1} parent=1 // pred_region
      %437 = dma.done [#allocation4], 16
    $region29: #{tpu_custom_call.1} parent=1 // pred_fallthru
      _
    %438 = vsyncpa [#allocation4], 1

</llo_original>
